<compile_context>
chip_gen: v7x
topology: tpu7x:2x2x1
jax: 0.10.0
libtpu: 0.0.40
codegen_flags: <defaults>
</compile_context>

<pallas_src>
import functools

import jax
import jax.numpy as jnp
from jax.experimental import pallas as pl
from jax.experimental.pallas import tpu as pltpu


def _token_exchange_kernel(mask_ref, x0_ref, x1_ref, out_ref, *, thr):
    # mask_ref: (TM, 1) f32; x0/x1/out: (TM, TC).  Pure VPU select, mask column
    # broadcast over the lane (channel) axis.
    keep = mask_ref[...] >= thr
    out_ref[...] = jnp.where(keep, x1_ref[...], x0_ref[...])


def _round_up(x, m):
    return ((x + m - 1) // m) * m


def _pick_col_tile(c):
    if c % 128 != 0:
        return c                       # full-channel block (small / test-sized C)
    if c <= 4096:
        return c                       # lane-dense, whole channel dim per tile
    for tc in (2048, 1024, 512, 256, 128):
        if c % tc == 0:
            return tc
    return 128                          # unreachable: c % 128 == 0 guarantees 128


def _pick_row_tile(tc, itemsize, n_rows, row_align, budget_bytes=20 << 20):
    # Double-buffered working set: 2 buffers x (x0 + x1 + out tiles + mask tile).
    per_row = 2 * (3 * tc * itemsize + 128 * 4)
    tm = max(row_align, budget_bytes // per_row)
    tm = (tm // row_align) * row_align
    tm = min(tm, 1024)                             # diminishing returns past ~1024
    tm = min(tm, _round_up(n_rows, row_align))     # don't over-tile tiny inputs
    return max(row_align, int(tm))


@functools.partial(jax.jit, static_argnums=(3,))
def token_exchange(x0, x1, mask1, mask_threshold):
    """out[b, n, :] = x1[b, n, :] if mask1[b, n] >= mask_threshold else x0[b, n, :]."""
    B, N, C = x0.shape
    assert x1.shape == (B, N, C) and mask1.shape == (B, N)
    out_dtype = x1.dtype
    x0 = x0.astype(out_dtype)
    itemsize = jnp.dtype(out_dtype).itemsize
    row_align = max(8, 32 // itemsize)             # full sublane packing (8/16/32)
    # TODO(synk): if mask_threshold ever becomes a traced value, route it through
    # scalar prefetch instead of closing over it as a constant.
    thr = float(mask_threshold)

    M = B * N
    x0_s = x0.reshape(M, C)                        # free (contiguous) reshapes
    x1_s = x1.reshape(M, C)
    m_s = mask1.reshape(M, 1).astype(jnp.float32)

    TC = _pick_col_tile(C)
    TM = _pick_row_tile(TC, itemsize, M, row_align)
    grid = (pl.cdiv(M, TM), pl.cdiv(C, TC))        # ragged row edge handled by Pallas

    # Scoped VMEM: double-buffered tiles + headroom, capped below v7x's 64 MiB.
    ws_bytes = 2 * (3 * TM * TC * itemsize + TM * 128 * 4)
    vmem_limit = int(min(64 << 20, max(32 << 20, 2 * ws_bytes)))

    kernel = functools.partial(_token_exchange_kernel, thr=thr)
    out_slab = pl.pallas_call(
        kernel,
        out_shape=jax.ShapeDtypeStruct((M, C), out_dtype),
        grid=grid,
        in_specs=[
            pl.BlockSpec((TM, 1), lambda i, j: (i, 0)),    # mask (row-indexed only)
            pl.BlockSpec((TM, TC), lambda i, j: (i, j)),   # x0
            pl.BlockSpec((TM, TC), lambda i, j: (i, j)),   # x1
        ],
        out_specs=pl.BlockSpec((TM, TC), lambda i, j: (i, j)),
        compiler_params=pltpu.CompilerParams(
            dimension_semantics=("parallel", "parallel"),
            vmem_limit_bytes=vmem_limit,
        ),
    )(m_s, x0_s, x1_s)

    return out_slab.reshape(B, N, C)


if __name__ == "__main__":
    key = jax.random.PRNGKey(0)
    k0, k1, km = jax.random.split(key, 3)
    mask_threshold = 0.5

    # Case 1: small, non-128-multiple channel count (full-channel-block path).
    B, N, C = 2, 8, 32
    x0 = jax.random.normal(k0, (B, N, C), dtype=jnp.float32)
    x1 = jax.random.normal(k1, (B, N, C), dtype=jnp.float32)
    mask1 = jax.random.uniform(km, (B, N), dtype=jnp.float32)
    out = jax.block_until_ready(token_exchange(x0, x1, mask1, mask_threshold))
    ref = jnp.where((mask1 >= mask_threshold)[..., None], x1, x0)
    assert out.shape == ref.shape and out.dtype == ref.dtype
    assert jnp.array_equal(out, ref), "mismatch vs reference (C=32 path)"

    # Case 2: lane-dense channel count (exercises the [M, C] row-select path).
    B2, N2, C2 = 2, 8, 128
    x0b = jax.random.normal(k0, (B2, N2, C2), dtype=jnp.float32)
    x1b = jax.random.normal(k1, (B2, N2, C2), dtype=jnp.float32)
    mask1b = jax.random.uniform(km, (B2, N2), dtype=jnp.float32)
    outb = jax.block_until_ready(token_exchange(x0b, x1b, mask1b, mask_threshold))
    refb = jnp.where((mask1b >= mask_threshold)[..., None], x1b, x0b)
    assert jnp.array_equal(outb, refb), "mismatch vs reference (C=128 path)"

    print("KERNEL_OK")
</pallas_src>

<mosaic_0001>
module attributes {stable_mosaic.version = 11 : i64} {
  func.func @_token_exchange_kernel(%arg0: i32, %arg1: i32, %arg2: memref<16x1xf32, #tpu.memory_space<vmem>>, %arg3: memref<16x32xf32, #tpu.memory_space<vmem>>, %arg4: memref<16x32xf32, #tpu.memory_space<vmem>>, %arg5: memref<16x32xf32, #tpu.memory_space<vmem>>) attributes {dimension_semantics = [#tpu.dimension_semantics<parallel>, #tpu.dimension_semantics<parallel>], iteration_bounds = array<i64: 1, 1>, scalar_prefetch = 0 : i64, scratch_operands = 0 : i64, tpu.core_type = #tpu.core_type<tc>, window_params = [{transform_indices = @transform_0, window_bounds = array<i64: 16, 1>}, {transform_indices = @transform_1, window_bounds = array<i64: 16, 32>}, {transform_indices = @transform_2, window_bounds = array<i64: 16, 32>}, {transform_indices = @transform_3, window_bounds = array<i64: 16, 32>}]} {
    %c0 = arith.constant 0 : index
    %c0_0 = arith.constant 0 : index
    %0 = vector.load %arg2[%c0, %c0_0] : memref<16x1xf32, #tpu.memory_space<vmem>>, vector<16x1xf32>
    %cst = arith.constant 5.000000e-01 : f32
    %1 = vector.broadcast %cst : f32 to vector<16x1xf32>
    %2 = arith.cmpf oge, %0, %1 : vector<16x1xf32>
    %c0_1 = arith.constant 0 : index
    %c0_2 = arith.constant 0 : index
    %3 = vector.load %arg4[%c0_1, %c0_2] : memref<16x32xf32, #tpu.memory_space<vmem>>, vector<16x32xf32>
    %c0_3 = arith.constant 0 : index
    %c0_4 = arith.constant 0 : index
    %4 = vector.load %arg3[%c0_3, %c0_4] : memref<16x32xf32, #tpu.memory_space<vmem>>, vector<16x32xf32>
    %5 = vector.shape_cast %2 : vector<16x1xi1> to vector<16x1xi1>
    %6 = vector.broadcast %5 : vector<16x1xi1> to vector<16x32xi1>
    %7 = arith.select %6, %3, %4 : vector<16x32xi1>, vector<16x32xf32>
    %c0_5 = arith.constant 0 : index
    %c0_6 = arith.constant 0 : index
    %8 = vector.load %arg5[%c0_5, %c0_6] : memref<16x32xf32, #tpu.memory_space<vmem>>, vector<16x32xf32>
    tpu.vector_store %arg5[%c0_5, %c0_6], %7 {strides = array<i32>} : memref<16x32xf32, #tpu.memory_space<vmem>>, vector<16x32xf32>,
    return
  }
  func.func @transform_0(%arg0: i32, %arg1: i32) -> (i32, i32) {
    %c0_i32 = arith.constant 0 : i32
    %c0_i32_0 = arith.constant 0 : i32
    return %arg0, %c0_i32 : i32, i32
  }
  func.func @transform_1(%arg0: i32, %arg1: i32) -> (i32, i32) {
    %c0_i32 = arith.constant 0 : i32
    return %arg0, %arg1 : i32, i32
  }
  func.func @transform_2(%arg0: i32, %arg1: i32) -> (i32, i32) {
    %c0_i32 = arith.constant 0 : i32
    return %arg0, %arg1 : i32, i32
  }
  func.func @transform_3(%arg0: i32, %arg1: i32) -> (i32, i32) {
    %c0_i32 = arith.constant 0 : i32
    return %arg0, %arg1 : i32, i32
  }
}

</mosaic_0001>

<llo_original>
// kernel: token_exchange.1
$region0: #{token_exchange.1}
  #allocation0 [shape = 'u32[]', space=smem, size = 0x4, offset = 0x4, fixed_abs, tag = 'smem constant byte address 0x4 - core index']
  #allocation1 [shape = 'u32[144,128]{1,0:T(1,128)}', space=vmem, size = 0x12000, scoped, tag = 'internal scratch']
  %s0 = inlined_call_operand.vmem [shape: f32[16,1], index: 0, kind: input, shape index: {}]
  %s1 = inlined_call_operand.vmem [shape: f32[16,32], index: 1, kind: input, shape index: {}]
  %s2 = inlined_call_operand.hbm [shape: f32[16,32], index: 2, kind: input, shape index: {}]
  %s3 = inlined_call_operand.hbm [shape: f32[16,32], index: 3, kind: output, shape index: {}]
  %s4 = sld [smem:[#allocation0]]
  $region26: #{token_exchange.1} parent=0
    _
  %s6 = ssub.s32 1, %s4
  %s7 = scalar_select 0, %s6, %s4
  $region1: #{token_exchange.1} parent=0
    #allocation2 [shape = 'u8[8192]{0}', space=vmem, size = 0x2000, scoped, tag = 'input window, operand 2, single buffered']
    #allocation3 [shape = 's32[1]{0}', space=sflag, size = 0x4, scoped, tag = 'scoped memory for token_exchange.1']
    #allocation4 [shape = 's32[1]{0}', space=sflag, size = 0x4, scoped, tag = 'scoped memory for token_exchange.1']
    #allocation5 [shape = 'u8[8192]{0}', space=vmem, size = 0x2000, scoped, tag = 'output window, operand 0, single buffered']
    %8 = vsyncpa [#allocation3], 0
    %9 = vsyncpa [#allocation4], 0
    // Predicated region
    $region2: #{token_exchange.1} parent=1 // pred_check
      _
    $region3: #{token_exchange.1} parent=1 // pred_check_branch
      %11 = sbr.rel (0) target = $region5
    $region4: #{token_exchange.1} parent=1 // pred_region
      _
    $region5: #{token_exchange.1} parent=1 // pred_fallthru
      _
    // Predicated region
    $region6: #{token_exchange.1} parent=1 // pred_check
      _
    $region7: #{token_exchange.1} parent=1 // pred_check_branch
      %13 = sbr.rel (0) target = $region9
    $region8: #{token_exchange.1} parent=1 // pred_region
      _
    $region9: #{token_exchange.1} parent=1 // pred_fallthru
      _
    // Predicated region
    $region10: #{token_exchange.1} parent=1 // pred_check
      _
    $region11: #{token_exchange.1} parent=1 // pred_check_branch
      %15 = sbr.rel (0) target = $region13
    $region12: #{token_exchange.1} parent=1 // pred_region
      %s17 = ssub.s32 256, 256
      %18 = vsyncadd [#allocation3], %s17
      %s19 = sshll.u32 [#allocation2], 4
      %s20 = int_to_ptr.vmem [resolvable:$true] %s19
      %25 = dma.hbm_to_vmem [thread:$0]  %s2, 256, %s20, [#allocation3], 128, 128, 8
    $region13: #{token_exchange.1} parent=1 // pred_fallthru
      _
    // Predicated region
    $region14: #{token_exchange.1} parent=1 // pred_check
      _
    $region15: #{token_exchange.1} parent=1 // pred_check_branch
      %27 = sbr.rel (0) target = $region17
    $region16: #{token_exchange.1} parent=1 // pred_region
      %28 = dma.done [#allocation3], 256
    $region17: #{token_exchange.1} parent=1 // pred_fallthru
      _
    %v29 = vld [vmem:[%s0] sm:$0xff]
    %v30 = vld [vmem:[%s0 + $0x8] sm:$0xff]
    %vm31 = vcmp.ge.f32.partialorder %v29, 0.5
    %vm32 = vcmp.ge.f32.partialorder %v30, 0.5
    %v33 = vld [vmem:[#allocation2] sm:$0xff]
    %v34 = vld [vmem:[#allocation2 + $0x8] sm:$0xff]
    %v35 = vld [vmem:[%s1] sm:$0xff]
    %v36 = vld [vmem:[%s1 + $0x8] sm:$0xff]
    %v37 = vsel %vm31, 1, 0
    %v38 = vsel %vm32, 1, 0
    %39 = vset.pattern.permute.xlu0 0
    %40 = vperm.xlu0 %39, %v37
    %v41 = vpop.permute.xlu0 %40
    %42 = vset.pattern.permute.xlu0 0
    %43 = vperm.xlu0 %42, %v38
    %v44 = vpop.permute.xlu0 %43
    %vm45 = vcmp.eq.s32.totalorder %v41, 1
    %vm46 = vcmp.eq.s32.totalorder %v44, 1
    %v47 = vsel %vm45, %v33, %v35
    %v48 = vsel %vm46, %v34, %v36
    %vm49 = vcmask 261120
    %50 = vst.msk [vmem:[#allocation5] sm:$0xff] %vm49, %v47
    %51 = vst.msk [vmem:[#allocation5 + $0x8] sm:$0xff] %vm49, %v48
    // Predicated region
    $region18: #{token_exchange.1} parent=1 // pred_check
      _
    $region19: #{token_exchange.1} parent=1 // pred_check_branch
      %53 = sbr.rel (0) target = $region21
    $region20: #{token_exchange.1} parent=1 // pred_region
      %s55 = ssub.s32 256, 256
      %56 = vsyncadd [#allocation4], %s55
      %s57 = sshll.u32 [#allocation5], 4
      %s58 = int_to_ptr.vmem [resolvable:$true] %s57
      %63 = dma.vmem_to_hbm [thread:$0]  %s58, 256, %s3, [#allocation4], 128, 128, 8
    $region21: #{token_exchange.1} parent=1 // pred_fallthru
      _
    // Predicated region
    $region22: #{token_exchange.1} parent=1 // pred_check
      _
    $region23: #{token_exchange.1} parent=1 // pred_check_branch
      %65 = sbr.rel (0) target = $region25
    $region24: #{token_exchange.1} parent=1 // pred_region
      %66 = dma.done [#allocation4], 256
    $region25: #{token_exchange.1} parent=1 // pred_fallthru
      _
    %67 = vsyncpa [#allocation3], 1
    %68 = vsyncpa [#allocation4], 1

</llo_original>
